<compile_context>
chip_gen: v7x
topology: tpu7x:2x2x1
jax: 0.10.0
libtpu: 0.0.40
codegen_flags: <defaults>
</compile_context>

<pallas_src>
import functools

import jax
import jax.numpy as jnp
from jax.experimental import pallas as pl
from jax.experimental.pallas import tpu as pltpu


def _mlp_kernel(x_ref, w1_ref, b1_ref, w2_ref, b2_ref, o_ref):
    # fc1: [TB, in] @ [in, hidden] + [1, hidden], then ReLU (f32 epilogue,
    # safe on v5e which has no bf16 VPU).
    h = jnp.dot(x_ref[...], w1_ref[...], preferred_element_type=jnp.float32)
    h = jnp.maximum(h + b1_ref[...], 0.0)
    # fc2: [TB, hidden] @ [hidden, num_classes] + [1, num_classes]
    out = jnp.dot(h.astype(w2_ref.dtype), w2_ref[...],
                  preferred_element_type=jnp.float32)
    o_ref[...] = (out + b2_ref[...]).astype(o_ref.dtype)


def _round_up(n, m):
    return ((n + m - 1) // m) * m


@functools.partial(
    jax.jit, static_argnames=("input_size", "block_b", "min_pallas_batch"))
def current_forward(x, w1, b1, w2, b2, *, input_size, block_b=1024,
                    min_pallas_batch=512):
    """Pallas equivalent of Current.forward.

    x  : any shape that flattens to [-1, input_size]
    w1 : [input_size, hidden]     (PyTorch fc1.weight.T)
    b1 : [1, hidden]
    w2 : [hidden, num_classes]    (PyTorch fc2.weight.T)
    b2 : [1, num_classes]
    """
    x2d = x.reshape(-1, input_size)                 # x.view(-1, input_size)
    B = x2d.shape[0]
    hidden = w1.shape[1]
    num_classes = w2.shape[1]

    # ---- small-batch fallback ----------------------------------------------
    # At tiny batches the work is a few KFLOPs; pallas_call launch + DMA setup
    # (µs-scale) dominates and XLA fuses the MLP better.  (B is static under
    # jit so this branch is resolved at trace time.)
    if B < min_pallas_batch:
        return jnp.maximum(x2d @ w1 + b1, 0.0) @ w2 + b2

    # ---- batch tiling --------------------------------------------------------
    # Tile is a multiple of 8 (sublane) and sized so the grid keeps >= 2 steps
    # (both TensorCores get work on v7x).  No explicit batch pad: the ragged
    # edge block is handled by Pallas (OOB reads masked, OOB writes dropped).
    tb = max(8, min(block_b, _round_up(pl.cdiv(B, 2), 8)))
    grid_b = pl.cdiv(B, tb)

    # ---- VMEM budget (double-buffered activation tiles + resident weights) --
    itemsize = x2d.dtype.itemsize
    act_bytes = 2 * tb * (input_size + num_classes) * itemsize
    wgt_bytes = 2 * (input_size * hidden + hidden
                     + hidden * num_classes + num_classes) * itemsize
    vmem_limit = int(min(max(4 * (act_bytes + wgt_bytes), 16 * 1024 * 1024),
                         64 * 1024 * 1024))

    out = pl.pallas_call(
        _mlp_kernel,
        out_shape=jax.ShapeDtypeStruct((B, num_classes), x2d.dtype),
        grid_spec=pltpu.PrefetchScalarGridSpec(
            num_scalar_prefetch=0,
            grid=(grid_b,),
            in_specs=[
                # activations: one batch tile per grid step (pipelined)
                pl.BlockSpec((tb, input_size), lambda i: (i, 0)),
                # weights / biases: constant index map -> VMEM-resident
                pl.BlockSpec((input_size, hidden), lambda i: (0, 0)),
                pl.BlockSpec((1, hidden), lambda i: (0, 0)),
                pl.BlockSpec((hidden, num_classes), lambda i: (0, 0)),
                pl.BlockSpec((1, num_classes), lambda i: (0, 0)),
            ],
            out_specs=pl.BlockSpec((tb, num_classes), lambda i: (i, 0)),
        ),
        compiler_params=pltpu.CompilerParams(
            dimension_semantics=("parallel",),
            vmem_limit_bytes=vmem_limit),
    )(x2d, w1, b1, w2, b2)

    return out


if __name__ == "__main__":
    # Module hyper-parameters (synthetic, deterministic).
    input_size = 64
    hidden_size = 32
    num_classes = 10

    key = jax.random.PRNGKey(0)
    kx, kw1, kb1, kw2, kb2 = jax.random.split(key, 5)

    # Example input: [2, 4, 16] -> view(-1, 64) -> [2, 64]
    x = jax.random.normal(kx, (2, 4, 16), dtype=jnp.float32)

    # Deterministic parameter init (uniform, like nn.Linear's default range).
    lim1 = 1.0 / jnp.sqrt(input_size)
    lim2 = 1.0 / jnp.sqrt(hidden_size)
    w1 = jax.random.uniform(kw1, (input_size, hidden_size),
                            minval=-lim1, maxval=lim1, dtype=jnp.float32)
    b1 = jax.random.uniform(kb1, (1, hidden_size),
                            minval=-lim1, maxval=lim1, dtype=jnp.float32)
    w2 = jax.random.uniform(kw2, (hidden_size, num_classes),
                            minval=-lim2, maxval=lim2, dtype=jnp.float32)
    b2 = jax.random.uniform(kb2, (1, num_classes),
                            minval=-lim2, maxval=lim2, dtype=jnp.float32)

    ref_fn = lambda xx: jnp.maximum(
        xx.reshape(-1, input_size) @ w1 + b1, 0.0) @ w2 + b2

    # 1) Small-shape run forced through the Pallas path (ragged single block).
    out = current_forward(x, w1, b1, w2, b2, input_size=input_size,
                          min_pallas_batch=0)
    out = jax.block_until_ready(out)
    assert out.shape == (2, num_classes)
    assert jnp.allclose(out, ref_fn(x), atol=1e-5, rtol=1e-5)

    # 2) Small-shape run through the default (jnp fallback) path.
    out_fb = current_forward(x, w1, b1, w2, b2, input_size=input_size)
    out_fb = jax.block_until_ready(out_fb)
    assert jnp.allclose(out_fb, ref_fn(x), atol=1e-5, rtol=1e-5)

    # 3) Larger batch (non-multiple of the tile) to exercise the tiled,
    #    parallel, ragged-edge grid path.
    xb = jax.random.normal(kx, (1000, input_size), dtype=jnp.float32)
    outb = current_forward(xb, w1, b1, w2, b2, input_size=input_size)
    outb = jax.block_until_ready(outb)
    refb = jnp.maximum(xb @ w1 + b1, 0.0) @ w2 + b2
    assert outb.shape == (1000, num_classes)
    assert jnp.allclose(outb, refb, atol=1e-5, rtol=1e-5)

    print("KERNEL_OK")
</pallas_src>

<mosaic_0001>
module attributes {stable_mosaic.version = 11 : i64} {
  func.func @_mlp_kernel(%arg0: i32, %arg1: memref<8x64xf32, #tpu.memory_space<vmem>>, %arg2: memref<64x32xf32, #tpu.memory_space<vmem>>, %arg3: memref<1x32xf32, #tpu.memory_space<vmem>>, %arg4: memref<32x10xf32, #tpu.memory_space<vmem>>, %arg5: memref<1x10xf32, #tpu.memory_space<vmem>>, %arg6: memref<8x10xf32, #tpu.memory_space<vmem>>) attributes {dimension_semantics = [#tpu.dimension_semantics<parallel>], iteration_bounds = array<i64: 1>, scalar_prefetch = 0 : i64, scratch_operands = 0 : i64, tpu.core_type = #tpu.core_type<tc>, window_params = [{transform_indices = @transform_0, window_bounds = array<i64: 8, 64>}, {pipeline_mode = #tpu.pipeline_mode<synchronous>, transform_indices = @transform_1, window_bounds = array<i64: 64, 32>}, {pipeline_mode = #tpu.pipeline_mode<synchronous>, transform_indices = @transform_2, window_bounds = array<i64: 1, 32>}, {pipeline_mode = #tpu.pipeline_mode<synchronous>, transform_indices = @transform_3, window_bounds = array<i64: 32, 10>}, {pipeline_mode = #tpu.pipeline_mode<synchronous>, transform_indices = @transform_4, window_bounds = array<i64: 1, 10>}, {transform_indices = @transform_5, window_bounds = array<i64: 8, 10>}]} {
    %c0 = arith.constant 0 : index
    %c0_0 = arith.constant 0 : index
    %0 = vector.load %arg1[%c0, %c0_0] : memref<8x64xf32, #tpu.memory_space<vmem>>, vector<8x64xf32>
    %c0_1 = arith.constant 0 : index
    %c0_2 = arith.constant 0 : index
    %1 = vector.load %arg2[%c0_1, %c0_2] : memref<64x32xf32, #tpu.memory_space<vmem>>, vector<64x32xf32>
    %cst = arith.constant dense<0.000000e+00> : vector<8x32xf32>
    %2 = tpu.matmul %0, %1, %cst {dimension_numbers = #tpu.dot_dimension_numbers<[1], [0], [0], [1], [0, 0, 1, 1], [], []>} : vector<8x64xf32>, vector<64x32xf32>, vector<8x32xf32> -> vector<8x32xf32>
    %c0_3 = arith.constant 0 : index
    %c0_4 = arith.constant 0 : index
    %3 = vector.load %arg3[%c0_3, %c0_4] : memref<1x32xf32, #tpu.memory_space<vmem>>, vector<1x32xf32>
    %4 = vector.broadcast %3 : vector<1x32xf32> to vector<8x32xf32>
    %5 = arith.addf %2, %4 : vector<8x32xf32>
    %cst_5 = arith.constant 0.000000e+00 : f32
    %6 = vector.broadcast %cst_5 : f32 to vector<8x32xf32>
    %7 = arith.maximumf %5, %6 : vector<8x32xf32>
    %c0_6 = arith.constant 0 : index
    %c0_7 = arith.constant 0 : index
    %8 = vector.load %arg4[%c0_6, %c0_7] : memref<32x10xf32, #tpu.memory_space<vmem>>, vector<32x10xf32>
    %cst_8 = arith.constant dense<0.000000e+00> : vector<8x10xf32>
    %9 = tpu.matmul %7, %8, %cst_8 {dimension_numbers = #tpu.dot_dimension_numbers<[1], [0], [0], [1], [0, 0, 1, 1], [], []>} : vector<8x32xf32>, vector<32x10xf32>, vector<8x10xf32> -> vector<8x10xf32>
    %c0_9 = arith.constant 0 : index
    %c0_10 = arith.constant 0 : index
    %10 = vector.load %arg5[%c0_9, %c0_10] : memref<1x10xf32, #tpu.memory_space<vmem>>, vector<1x10xf32>
    %11 = vector.broadcast %10 : vector<1x10xf32> to vector<8x10xf32>
    %12 = arith.addf %9, %11 : vector<8x10xf32>
    %c0_11 = arith.constant 0 : index
    %c0_12 = arith.constant 0 : index
    %13 = vector.load %arg6[%c0_11, %c0_12] : memref<8x10xf32, #tpu.memory_space<vmem>>, vector<8x10xf32>
    tpu.vector_store %arg6[%c0_11, %c0_12], %12 {strides = array<i32>} : memref<8x10xf32, #tpu.memory_space<vmem>>, vector<8x10xf32>,
    return
  }
  func.func @transform_0(%arg0: i32) -> (i32, i32) {
    %c0_i32 = arith.constant 0 : i32
    %c0_i32_0 = arith.constant 0 : i32
    return %arg0, %c0_i32 : i32, i32
  }
  func.func @transform_1(%arg0: i32) -> (i32, i32) {
    %c0_i32 = arith.constant 0 : i32
    %c0_i32_0 = arith.constant 0 : i32
    %c0_i32_1 = arith.constant 0 : i32
    return %c0_i32, %c0_i32_0 : i32, i32
  }
  func.func @transform_2(%arg0: i32) -> (i32, i32) {
    %c0_i32 = arith.constant 0 : i32
    %c0_i32_0 = arith.constant 0 : i32
    %c0_i32_1 = arith.constant 0 : i32
    return %c0_i32, %c0_i32_0 : i32, i32
  }
  func.func @transform_3(%arg0: i32) -> (i32, i32) {
    %c0_i32 = arith.constant 0 : i32
    %c0_i32_0 = arith.constant 0 : i32
    %c0_i32_1 = arith.constant 0 : i32
    return %c0_i32, %c0_i32_0 : i32, i32
  }
  func.func @transform_4(%arg0: i32) -> (i32, i32) {
    %c0_i32 = arith.constant 0 : i32
    %c0_i32_0 = arith.constant 0 : i32
    %c0_i32_1 = arith.constant 0 : i32
    return %c0_i32, %c0_i32_0 : i32, i32
  }
  func.func @transform_5(%arg0: i32) -> (i32, i32) {
    %c0_i32 = arith.constant 0 : i32
    %c0_i32_0 = arith.constant 0 : i32
    return %arg0, %c0_i32 : i32, i32
  }
}

</mosaic_0001>

<llo_original>
// kernel: current_forward.1
$region0: #{current_forward.1}
  #allocation0 [shape = 'u32[]', space=smem, size = 0x4, offset = 0x4, fixed_abs, tag = 'smem constant byte address 0x4 - core index']
  #allocation1 [shape = 'u32[144,128]{1,0:T(1,128)}', space=vmem, size = 0x12000, scoped, tag = 'internal scratch']
  %s0 = inlined_call_operand.vmem [shape: f32[2,64], index: 0, kind: input, shape index: {}]
  %s1 = inlined_call_operand.vmem [shape: f32[64,32], index: 1, kind: input, shape index: {}]
  %s2 = inlined_call_operand.vmem [shape: f32[1,32], index: 2, kind: input, shape index: {}]
  %s3 = inlined_call_operand.vmem [shape: f32[32,10], index: 3, kind: input, shape index: {}]
  %s4 = inlined_call_operand.vmem [shape: f32[1,10], index: 4, kind: input, shape index: {}]
  %s5 = inlined_call_operand.hbm [shape: f32[2,10], index: 5, kind: output, shape index: {}]
  %s6 = sld [smem:[#allocation0]]
  $region30: #{current_forward.1} parent=0
    _
  %s8 = ssub.s32 1, %s6
  %s9 = scalar_select 0, %s8, %s6
  $region1: #{current_forward.1} parent=0
    #allocation2 [shape = 'u8[4096]{0}', space=vmem, size = 0x1000, scoped, tag = 'output window, operand 0, single buffered']
    #allocation3 [shape = 's32[1]{0}', space=sflag, size = 0x4, scoped, tag = 'scoped memory for current_forward.1']
    %10 = vsyncpa [#allocation3], 0
    // Predicated region
    $region2: #{current_forward.1} parent=1 // pred_check
      _
    $region3: #{current_forward.1} parent=1 // pred_check_branch
      %12 = sbr.rel (0) target = $region5
    $region4: #{current_forward.1} parent=1 // pred_region
      _
    $region5: #{current_forward.1} parent=1 // pred_fallthru
      _
    // Predicated region
    $region6: #{current_forward.1} parent=1 // pred_check
      _
    $region7: #{current_forward.1} parent=1 // pred_check_branch
      %14 = sbr.rel (0) target = $region9
    $region8: #{current_forward.1} parent=1 // pred_region
      _
    $region9: #{current_forward.1} parent=1 // pred_fallthru
      _
    // Predicated region
    $region10: #{current_forward.1} parent=1 // pred_check
      _
    $region11: #{current_forward.1} parent=1 // pred_check_branch
      %16 = sbr.rel (0) target = $region13
    $region12: #{current_forward.1} parent=1 // pred_region
      _
    $region13: #{current_forward.1} parent=1 // pred_fallthru
      _
    // Predicated region
    $region14: #{current_forward.1} parent=1 // pred_check
      _
    $region15: #{current_forward.1} parent=1 // pred_check_branch
      %18 = sbr.rel (0) target = $region17
    $region16: #{current_forward.1} parent=1 // pred_region
      _
    $region17: #{current_forward.1} parent=1 // pred_fallthru
      _
    // Predicated region
    $region18: #{current_forward.1} parent=1 // pred_check
      _
    $region19: #{current_forward.1} parent=1 // pred_check_branch
      %20 = sbr.rel (0) target = $region21
    $region20: #{current_forward.1} parent=1 // pred_region
      _
    $region21: #{current_forward.1} parent=1 // pred_fallthru
      _
    %v21 = vld [vmem:[%s0] sm:$0xff]
    %v22 = vld [vmem:[%s1] sm:$0xff]
    %v23 = vld [vmem:[%s1 + $0x8] sm:$0xff]
    %v24 = vld [vmem:[%s1 + $0x10] sm:$0xff]
    %v25 = vld [vmem:[%s1 + $0x18] sm:$0xff]
    %v26 = vld [vmem:[%s1 + $0x20] sm:$0xff]
    %v27 = vld [vmem:[%s1 + $0x28] sm:$0xff]
    %v28 = vld [vmem:[%s1 + $0x30] sm:$0xff]
    %v29 = vld [vmem:[%s1 + $0x38] sm:$0xff]
    %v30 = vld [vmem:[%s2] sm:$0x1]
    %v32 = vlaneseq
    %v33 = vshrl.u32 %v32, 7
    %v34 = vsub.s32 0, %v33
    %v35 = vrot.slane %v30, %v34
    %vm37 = vcmask 523264
    %v39 = vsel %vm37, %v21, 0
    %41 = vmatprep.subr.mxu0 0.0
    %42 = vmatpush1.msra.mxu0 %v22
    %43 = vmatprep.subr.mxu0 0.0
    %44 = vmatpush1.msra.mxu0 %v23
    %45 = vmatprep.subr.mxu0 0.0
    %46 = vmatpush1.msra.mxu0 %v24
    %47 = vmatprep.subr.mxu0 0.0
    %48 = vmatpush1.msra.mxu0 %v25
    %49 = vmatprep.subr.mxu0 0.0
    %50 = vmatpush1.msra.mxu0 %v26
    %51 = vmatprep.subr.mxu0 0.0
    %52 = vmatpush1.msra.mxu0 %v27
    %53 = vmatprep.subr.mxu0 0.0
    %54 = vmatpush1.msra.mxu0 %v28
    %55 = vmatprep.subr.mxu0 0.0
    %56 = vmatpush1.msra.mxu0 %v29
    %57 = vmatprep.subr.mxu0 0.0
    %58 = vmatpush1.msra.mxu0 0.0
    %59 = vmatprep.subr.mxu0 0.0
    %60 = vmatpush1.msra.mxu0 0.0
    %61 = vmatprep.subr.mxu0 0.0
    %62 = vmatpush1.msra.mxu0 0.0
    %63 = vmatprep.subr.mxu0 0.0
    %64 = vmatpush1.msra.mxu0 0.0
    %65 = vmatprep.subr.mxu0 0.0
    %66 = vmatpush1.msra.mxu0 0.0
    %67 = vmatprep.subr.mxu0 0.0
    %68 = vmatpush1.msra.mxu0 0.0
    %69 = vmatprep.subr.mxu0 0.0
    %70 = vmatpush1.msra.mxu0 0.0
    %71 = vmatprep.subr.mxu0 0.0
    %72 = vmatpush1.msra.mxu0 0.0
    %73 = vmatprep.subr.mxu0 0.0
    %74 = vmatpush1.msra.mxu0 0.0
    %75 = vmatprep.subr.mxu0 0.0
    %76 = vmatpush1.msra.mxu0 0.0
    %77 = vmatprep.subr.mxu0 0.0
    %78 = vmatpush1.msra.mxu0 0.0
    %79 = vmatprep.subr.mxu0 0.0
    %80 = vmatpush1.msra.mxu0 0.0
    %81 = vmatprep.subr.mxu0 0.0
    %82 = vmatpush1.msra.mxu0 0.0
    %83 = vmatprep.subr.mxu0 0.0
    %84 = vmatpush1.msra.mxu0 0.0
    %85 = vmatprep.subr.mxu0 0.0
    %86 = vmatpush1.msra.mxu0 0.0
    %87 = vmatprep.subr.mxu0 0.0
    %88 = vmatpush1.msra.mxu0 0.0
    %89 = vmatprep.subr.mxu0 0.0
    %90 = vmatpush1.msra.mxu0 0.0
    %91 = vmatprep.subr.mxu0 0.0
    %92 = vmatpush1.msra.mxu0 0.0
    %93 = vmatprep.subr.mxu0 0.0
    %94 = vmatpush1.msra.mxu0 0.0
    %95 = vmatprep.subr.mxu0 0.0
    %96 = vmatpush1.msra.mxu0 0.0
    %97 = vmatprep.subr.mxu0 0.0
    %98 = vmatpush1.msra.mxu0 0.0
    %99 = vmatprep.subr.mxu0 0.0
    %100 = vmatpush1.msra.mxu0 0.0
    %101 = vmatprep.subr.mxu0 0.0
    %102 = vmatpush1.msra.mxu0 0.0
    %103 = vmatprep.subr.mxu0 0.0
    %104 = vmatpush1.msra.mxu0 0.0
    %105 = vmatprep.mubr.f32.mxu0 0.0
    %106 = vmatmul.mubr.f32.gmra.mrb[0].mxu0 %v39
    %v107 = vpop.f32.mrb[0].mxu0
    %v108 = vadd.f32 %v35, %v107
    %v109 = vpop.f32.mrb[0].mxu0
    %110 = vdwg.mxu0
    %v111 = vmax.f32 %v108, 0.0
    %v112 = vld [vmem:[%s3] sm:$0xff]
    %v113 = vld [vmem:[%s3 + $0x8] sm:$0xff]
    %v114 = vld [vmem:[%s3 + $0x10] sm:$0xff]
    %v115 = vld [vmem:[%s3 + $0x18] sm:$0xff]
    %v116 = vld [vmem:[%s4] sm:$0x1]
    %v118 = vlaneseq
    %v119 = vshrl.u32 %v118, 7
    %v120 = vsub.s32 0, %v119
    %v121 = vrot.slane %v116, %v120
    %vm123 = vcmask 261120
    %v125 = vsel %vm123, %v111, 0
    %127 = vmatprep.subr.mxu0 0.0
    %128 = vmatpush1.msra.mxu0 %v112
    %129 = vmatprep.subr.mxu0 0.0
    %130 = vmatpush1.msra.mxu0 %v113
    %131 = vmatprep.subr.mxu0 0.0
    %132 = vmatpush1.msra.mxu0 %v114
    %133 = vmatprep.subr.mxu0 0.0
    %134 = vmatpush1.msra.mxu0 %v115
    %135 = vmatprep.subr.mxu0 0.0
    %136 = vmatpush1.msra.mxu0 0.0
    %137 = vmatprep.subr.mxu0 0.0
    %138 = vmatpush1.msra.mxu0 0.0
    %139 = vmatprep.subr.mxu0 0.0
    %140 = vmatpush1.msra.mxu0 0.0
    %141 = vmatprep.subr.mxu0 0.0
    %142 = vmatpush1.msra.mxu0 0.0
    %143 = vmatprep.subr.mxu0 0.0
    %144 = vmatpush1.msra.mxu0 0.0
    %145 = vmatprep.subr.mxu0 0.0
    %146 = vmatpush1.msra.mxu0 0.0
    %147 = vmatprep.subr.mxu0 0.0
    %148 = vmatpush1.msra.mxu0 0.0
    %149 = vmatprep.subr.mxu0 0.0
    %150 = vmatpush1.msra.mxu0 0.0
    %151 = vmatprep.subr.mxu0 0.0
    %152 = vmatpush1.msra.mxu0 0.0
    %153 = vmatprep.subr.mxu0 0.0
    %154 = vmatpush1.msra.mxu0 0.0
    %155 = vmatprep.subr.mxu0 0.0
    %156 = vmatpush1.msra.mxu0 0.0
    %157 = vmatprep.subr.mxu0 0.0
    %158 = vmatpush1.msra.mxu0 0.0
    %159 = vmatprep.subr.mxu0 0.0
    %160 = vmatpush1.msra.mxu0 0.0
    %161 = vmatprep.subr.mxu0 0.0
    %162 = vmatpush1.msra.mxu0 0.0
    %163 = vmatprep.subr.mxu0 0.0
    %164 = vmatpush1.msra.mxu0 0.0
    %165 = vmatprep.subr.mxu0 0.0
    %166 = vmatpush1.msra.mxu0 0.0
    %167 = vmatprep.subr.mxu0 0.0
    %168 = vmatpush1.msra.mxu0 0.0
    %169 = vmatprep.subr.mxu0 0.0
    %170 = vmatpush1.msra.mxu0 0.0
    %171 = vmatprep.subr.mxu0 0.0
    %172 = vmatpush1.msra.mxu0 0.0
    %173 = vmatprep.subr.mxu0 0.0
    %174 = vmatpush1.msra.mxu0 0.0
    %175 = vmatprep.subr.mxu0 0.0
    %176 = vmatpush1.msra.mxu0 0.0
    %177 = vmatprep.subr.mxu0 0.0
    %178 = vmatpush1.msra.mxu0 0.0
    %179 = vmatprep.subr.mxu0 0.0
    %180 = vmatpush1.msra.mxu0 0.0
    %181 = vmatprep.subr.mxu0 0.0
    %182 = vmatpush1.msra.mxu0 0.0
    %183 = vmatprep.subr.mxu0 0.0
    %184 = vmatpush1.msra.mxu0 0.0
    %185 = vmatprep.subr.mxu0 0.0
    %186 = vmatpush1.msra.mxu0 0.0
    %187 = vmatprep.subr.mxu0 0.0
    %188 = vmatpush1.msra.mxu0 0.0
    %189 = vmatprep.subr.mxu0 0.0
    %190 = vmatpush1.msra.mxu0 0.0
    %191 = vmatprep.mubr.f32.mxu0 0.0
    %192 = vmatmul.mubr.f32.gmra.mrb[0].mxu0 %v125
    %v193 = vpop.f32.mrb[0].mxu0
    %v194 = vadd.f32 %v121, %v193
    %v195 = vpop.f32.mrb[0].mxu0
    %196 = vdwg.mxu0
    %vm197 = vcmask 80896
    %198 = vst.msk [vmem:[#allocation2] sm:$0xff] %vm197, %v194
    // Predicated region
    $region22: #{current_forward.1} parent=1 // pred_check
      _
    $region23: #{current_forward.1} parent=1 // pred_check_branch
      %200 = sbr.rel (0) target = $region25
    $region24: #{current_forward.1} parent=1 // pred_region
      %s202 = ssub.s32 128, 32
      %203 = vsyncadd [#allocation3], %s202
      %s204 = sshll.u32 [#allocation2], 4
      %s205 = int_to_ptr.vmem [resolvable:$true] %s204
      %210 = dma.vmem_to_hbm [thread:$0]  %s205, 32, %s5, [#allocation3], 32, 32, 2
    $region25: #{current_forward.1} parent=1 // pred_fallthru
      _
    // Predicated region
    $region26: #{current_forward.1} parent=1 // pred_check
      _
    $region27: #{current_forward.1} parent=1 // pred_check_branch
      %212 = sbr.rel (0) target = $region29
    $region28: #{current_forward.1} parent=1 // pred_region
      %213 = dma.done [#allocation3], 128
    $region29: #{current_forward.1} parent=1 // pred_fallthru
      _
    %214 = vsyncpa [#allocation3], 1

</llo_original>
